<compile_context>
chip_gen: v5e
topology: v5e:2x2
jax: 0.10.0
libtpu: 0.0.40
codegen_flags: <defaults>
</compile_context>

<pallas_src>
import jax
import jax.numpy as jnp
from jax import lax
from jax.experimental import pallas as pl
from jax.experimental.pallas import tpu as pltpu

# ---------------- config (mirrors Contrastive.__init__ hyper-params) --------
BS = 2
FEATURE_DIM = 8
OBS_DIM = 16
ACTION_DIM = 4
HIDDEN_DIM = 32
NUM_OBS_STEPS = 2          # params.training_params.num_observation_steps
NUM_PRED_STEPS = 2         # contrastive_params.num_pred_steps
NUM_NEG_SAMPLES = 7        # contrastive_params.num_negative_samples
DELTA_MIN, DELTA_MAX = -1.0, 1.0   # self.delta_feature_min / max
CTX_DIM = NUM_OBS_STEPS * FEATURE_DIM + ACTION_DIM
NUM_SAMPLES = 1 + NUM_NEG_SAMPLES

S_TOT = BS * NUM_NEG_SAMPLES + BS   # per-step sample rows: [negatives ; positives]
OUT_LANES = 128                     # lane-dense output width (>= FEATURE_DIM)
ACT_K = 8                           # action lanes padded to a sublane-friendly 8


def _ceil8(n):
    return -(-n // 8) * 8


# --------------- packed input layouts (computed once, Python side) ----------
# data slab: one DMA for every activation, 8-row-aligned sections.
DATA_COLS = max(OBS_DIM, FEATURE_DIM, ACT_K)
DATA_OBS_R0 = 0
DATA_NOBS_R0 = DATA_OBS_R0 + NUM_OBS_STEPS * BS          # obs/nobs contiguous (fused enc dot)
DATA_ACT_R0 = _ceil8(DATA_NOBS_R0 + NUM_PRED_STEPS * BS)
DATA_NEG_R0 = _ceil8(DATA_ACT_R0 + NUM_PRED_STEPS * BS)
DATA_ROWS = _ceil8(DATA_NEG_R0 + NUM_PRED_STEPS * BS * NUM_NEG_SAMPLES)


def _build_pslab_layout():
    layout = {}
    cur = 0

    def add(name, rows, cols):
        nonlocal cur
        layout[name] = (cur, rows, cols)
        cur += _ceil8(rows)

    add("w_enc", OBS_DIM, FEATURE_DIM)
    for t in range(NUM_OBS_STEPS):
        add("w1_f%d" % t, FEATURE_DIM, HIDDEN_DIM)
    add("w1_act", ACT_K, HIDDEN_DIM)          # real rows = ACTION_DIM, rest zero
    add("w1_delta", FEATURE_DIM, HIDDEN_DIM)
    add("w2", HIDDEN_DIM, OUT_LANES)          # real cols = FEATURE_DIM, rest zero
    add("b_enc", 1, FEATURE_DIM)
    add("b1", 1, HIDDEN_DIM)
    add("b2", 1, OUT_LANES)
    return layout, _ceil8(cur)


PSLAB_LAYOUT, PSLAB_ROWS = _build_pslab_layout()


# --------------------------- fused Pallas kernel ----------------------------
def _contrastive_fwd_kernel(data_ref, p_ref, out_ref):
    f32 = jnp.float32
    NEG = NUM_NEG_SAMPLES

    def pslice(name):
        r0, rows, cols = PSLAB_LAYOUT[name]
        return p_ref[r0:r0 + rows, 0:cols]

    # weights / biases (loaded once, reused across the unrolled rollout)
    w_enc = pslice("w_enc")                                   # (OBS, F)
    w1_f = [pslice("w1_f%d" % t) for t in range(NUM_OBS_STEPS)]
    w1_act = pslice("w1_act")                                 # (8, H), rows>=A are zero
    w1_d = pslice("w1_delta")                                 # (F, H)
    w2p = pslice("w2")                                        # (H, 128), cols>=F zero
    b_enc = pslice("b_enc")                                   # (1, F)
    b1 = pslice("b1")                                         # (1, H)
    b2p = pslice("b2")                                        # (1, 128)

    # ---- encoder: ONE fused dot over row-stacked [obs ; next_obs] ----------
    enc_rows = (NUM_OBS_STEPS + NUM_PRED_STEPS) * BS
    enc_in = data_ref[0:enc_rows, 0:OBS_DIM]                              # (8, OBS)
    feat_all = jnp.dot(enc_in, w_enc, preferred_element_type=f32) + b_enc  # (8, F)

    # ---- hoisted, rollout-independent layer-1 contribution of the actions --
    act_in = data_ref[DATA_ACT_R0:DATA_ACT_R0 + NUM_PRED_STEPS * BS, 0:ACT_K]
    h_act_all = jnp.dot(act_in, w1_act, preferred_element_type=f32)       # (P*BS, H)

    neg_all = data_ref[DATA_NEG_R0:DATA_NEG_R0 + NUM_PRED_STEPS * BS * NEG,
                       0:FEATURE_DIM]                                     # (P*BS*NEG, F)

    # ---- loop-invariant one-hot replication / segment constants ------------
    def seg_of(row_iota):   # batch id of a negative-block row index, no int div
        s = jnp.zeros_like(row_iota)
        for k in range(1, BS):
            s = s + (row_iota >= k * NEG).astype(jnp.int32)
        return s

    r16 = lax.broadcasted_iota(jnp.int32, (S_TOT, BS), 0)
    c16 = lax.broadcasted_iota(jnp.int32, (S_TOT, BS), 1)
    row_batch = jnp.where(r16 < BS * NEG, seg_of(r16), r16 - BS * NEG)
    R_rep = (row_batch == c16).astype(f32)                    # (S_TOT, BS) sample->batch

    if NUM_PRED_STEPS > 1:
        rn = lax.broadcasted_iota(jnp.int32, (BS * NEG, BS), 0)
        cn = lax.broadcasted_iota(jnp.int32, (BS * NEG, BS), 1)
        R_neg = (seg_of(rn) == cn).astype(f32)                # (BS*NEG, BS)
        rt = lax.broadcasted_iota(jnp.int32, (BS, BS * NEG), 1)
        ct = lax.broadcasted_iota(jnp.int32, (BS, BS * NEG), 0)
        R_negT = (seg_of(rt) == ct).astype(f32)               # (BS, BS*NEG)
        sr = lax.broadcasted_iota(jnp.int32, (BS, BS * NEG, FEATURE_DIM), 1)
        sb = lax.broadcasted_iota(jnp.int32, (BS, BS * NEG, FEATURE_DIM), 0)
        seg_mask = (seg_of(sr) == sb)                         # (BS, BS*NEG, F)
        rf = lax.broadcasted_iota(jnp.int32, (BS * NEG, FEATURE_DIM), 0)
        n_within = (rf - seg_of(rf) * NEG).astype(f32)        # within-batch neg index

    # features carried as a static list of (BS, F) blocks, oldest step first
    feats = [feat_all[t * BS:(t + 1) * BS, :] for t in range(NUM_OBS_STEPS)]

    for i in range(NUM_PRED_STEPS):           # static unroll (tiny trip count)
        nfeat_i = feat_all[(NUM_OBS_STEPS + i) * BS:(NUM_OBS_STEPS + i + 1) * BS, :]
        neg_i = neg_all[i * BS * NEG:(i + 1) * BS * NEG, :]               # (BS*NEG, F)
        hact_i = h_act_all[i * BS:(i + 1) * BS, :]                        # (BS, H)

        # per-batch context hidden: split-weight partial dots (no lane concat)
        hc = hact_i + b1
        for t in range(NUM_OBS_STEPS):
            hc = hc + jnp.dot(feats[t], w1_f[t], preferred_element_type=f32)

        # delta rows as two contiguous blocks: [negatives ; positive]
        delta_pos = nfeat_i - feats[-1]                                   # (BS, F)
        df = jnp.concatenate([neg_i, delta_pos], axis=0)                  # (S_TOT, F)

        # fused layer-1: one-hot replication matmul + delta matmul, then relu
        h = (jnp.dot(R_rep, hc, preferred_element_type=f32)
             + jnp.dot(df, w1_d, preferred_element_type=f32))             # (S_TOT, H)
        h = jnp.maximum(h, 0.0)

        # layer-2 with lane-padded weight -> (S_TOT, 128) lane-dense energies
        e = jnp.dot(h, w2p, preferred_element_type=f32) + b2p
        out_ref[i * S_TOT:(i + 1) * S_TOT, :] = e               # unmasked full-lane store

        if i == NUM_PRED_STEPS - 1:
            break

        # hard argmax selection (gradient_through_all_samples=False branch),
        # batched over all batches with segment masks (no per-batch Python loop).
        # TODO(synk): gumbel_softmax hard-selection branch not implemented.
        neg_e = e[0:BS * NEG, 0:FEATURE_DIM]                              # (BS*NEG, F)
        masked = jnp.where(seg_mask, neg_e[None, :, :], -jnp.inf)
        m_b = jnp.max(masked, axis=1)                                     # (BS, F)
        m_rows = jnp.dot(R_neg, m_b, preferred_element_type=f32)          # exact one-hot gather
        cand = jnp.where(neg_e == m_rows, n_within, float(NEG))
        idx_b = jnp.min(jnp.where(seg_mask, cand[None, :, :], float(NEG)), axis=1)
        idx_rows = jnp.dot(R_neg, idx_b, preferred_element_type=f32)      # (BS*NEG, F)
        onehot = (n_within == idx_rows).astype(f32)
        delta_sel = jnp.dot(R_negT, onehot * neg_i,
                            preferred_element_type=f32)                   # (BS, F)

        pred_next = feats[-1] + delta_sel
        # cat_features: drop the oldest observation step, append predicted one
        feats = feats[1:] + [pred_next]


# ------------------------------ wrappers -------------------------------------
def pack_params(params):
    """One-time packing of every weight/bias into a single (PSLAB_ROWS, 128) slab."""
    slab = jnp.zeros((PSLAB_ROWS, OUT_LANES), jnp.float32)
    w1c = params["w1_ctx"]
    pieces = {
        "w_enc": params["w_enc"],
        "w1_act": w1c[NUM_OBS_STEPS * FEATURE_DIM:],
        "w1_delta": params["w1_delta"],
        "w2": params["w2"],
        "b_enc": params["b_enc"],
        "b1": params["b1"],
        "b2": params["b2"],
    }
    for t in range(NUM_OBS_STEPS):
        pieces["w1_f%d" % t] = w1c[t * FEATURE_DIM:(t + 1) * FEATURE_DIM]
    for name, x in pieces.items():
        r0, _, _ = PSLAB_LAYOUT[name]
        x = jnp.asarray(x, jnp.float32)
        slab = slab.at[r0:r0 + x.shape[0], 0:x.shape[1]].set(x)
    return slab


def contrastive_forward(param_slab, obses, actions, next_obses, neg_delta_features):
    """forward(): energies of shape (BS, NUM_PRED_STEPS, 1+num_neg, FEATURE_DIM)."""
    # wrapper-side layout plumbing (<3 KB, fused by XLA before the single call):
    # pack every activation into ONE step-major, row-stacked data slab.
    obs_sm = jnp.transpose(obses, (1, 0, 2)).reshape(NUM_OBS_STEPS * BS, OBS_DIM)
    nobs_sm = jnp.transpose(next_obses, (1, 0, 2)).reshape(NUM_PRED_STEPS * BS, OBS_DIM)
    act_sm = jnp.transpose(actions, (1, 0, 2)).reshape(NUM_PRED_STEPS * BS, ACTION_DIM)
    neg_sm = jnp.transpose(neg_delta_features, (1, 0, 2, 3)).reshape(
        NUM_PRED_STEPS * BS * NUM_NEG_SAMPLES, FEATURE_DIM)

    data = jnp.zeros((DATA_ROWS, DATA_COLS), jnp.float32)
    data = data.at[DATA_OBS_R0:DATA_OBS_R0 + obs_sm.shape[0], 0:OBS_DIM].set(obs_sm)
    data = data.at[DATA_NOBS_R0:DATA_NOBS_R0 + nobs_sm.shape[0], 0:OBS_DIM].set(nobs_sm)
    data = data.at[DATA_ACT_R0:DATA_ACT_R0 + act_sm.shape[0], 0:ACTION_DIM].set(act_sm)
    data = data.at[DATA_NEG_R0:DATA_NEG_R0 + neg_sm.shape[0], 0:FEATURE_DIM].set(neg_sm)

    out_rows = NUM_PRED_STEPS * S_TOT
    full = lambda shape: pl.BlockSpec(shape, lambda i: (0,) * len(shape))
    out2d = pl.pallas_call(
        _contrastive_fwd_kernel,
        out_shape=jax.ShapeDtypeStruct((out_rows, OUT_LANES), jnp.float32),
        grid=(1,),
        in_specs=[full((DATA_ROWS, DATA_COLS)), full((PSLAB_ROWS, OUT_LANES))],
        out_specs=full((out_rows, OUT_LANES)),
        # single grid step on a single core (no megacore sharding of tiny work)
        compiler_params=pltpu.CompilerParams(dimension_semantics=("arbitrary",)),
    )(data, param_slab)

    # un-pad / re-order (wrapper-side, <1 KB): per-step rows are [negatives ; positives]
    e = out2d[:, :FEATURE_DIM].reshape(NUM_PRED_STEPS, S_TOT, FEATURE_DIM)
    neg_e = e[:, :BS * NUM_NEG_SAMPLES, :].reshape(
        NUM_PRED_STEPS, BS, NUM_NEG_SAMPLES, FEATURE_DIM)
    pos_e = e[:, BS * NUM_NEG_SAMPLES:, :][:, :, None, :]
    energy = jnp.concatenate([pos_e, neg_e], axis=2)            # (P, BS, S, F)
    return jnp.transpose(energy, (1, 0, 2, 3))                  # (BS, P, S, F)


# --------------------------- params & pure-JAX reference ---------------------
def init_params(key):
    ks = jax.random.split(key, 6)
    scale = 0.1
    return {
        "w_enc": jax.random.normal(ks[0], (OBS_DIM, FEATURE_DIM), jnp.float32) * scale,
        "b_enc": jnp.zeros((1, FEATURE_DIM), jnp.float32),
        "w1_ctx": jax.random.normal(ks[1], (CTX_DIM, HIDDEN_DIM), jnp.float32) * scale,
        "w1_delta": jax.random.normal(ks[2], (FEATURE_DIM, HIDDEN_DIM), jnp.float32) * scale,
        "b1": jnp.zeros((1, HIDDEN_DIM), jnp.float32),
        "w2": jax.random.normal(ks[3], (HIDDEN_DIM, FEATURE_DIM), jnp.float32) * scale,
        "b2": jnp.zeros((1, FEATURE_DIM), jnp.float32),
    }


def forward_reference(params, obses, actions, next_obses, neg_delta_features):
    """Pure-jnp mirror of Contrastive.forward / forward_with_feature."""
    def enc(x):
        return x @ params["w_enc"] + params["b_enc"]

    def energy_fn(features, action, delta_features):
        bs = features.shape[0]
        ctx = jnp.concatenate([features.reshape(bs, -1), action], axis=-1)
        h = ((ctx @ params["w1_ctx"])[:, None, :]
             + delta_features @ params["w1_delta"] + params["b1"])
        h = jnp.maximum(h, 0.0)
        return h @ params["w2"] + params["b2"]

    features = enc(obses)                       # (BS, T, F)
    next_features = enc(next_obses)             # (BS, P, F)
    energies = []
    feats = features
    for i in range(NUM_PRED_STEPS):
        action = actions[:, i]
        neg_i = neg_delta_features[:, i]
        delta = (next_features[:, i] - feats[:, -1, :])[:, None, :]
        dfs = jnp.concatenate([delta, neg_i], axis=-2)
        e = energy_fn(feats, action, dfs)
        energies.append(e)
        if i == NUM_PRED_STEPS - 1:
            break
        neg_e = e[:, 1:, :]
        idx = jnp.argmax(neg_e, axis=-2)[:, None, :]
        sel = jnp.take_along_axis(neg_i, idx, axis=-2)[:, 0, :]
        pred = feats[:, -1, :] + sel
        feats = jnp.concatenate([feats[:, 1:, :], pred[:, None, :]], axis=-2)
    return jnp.stack(energies, axis=-3)


# --------------------------------- main --------------------------------------
if __name__ == "__main__":
    key = jax.random.PRNGKey(0)
    k_param, k_obs, k_act, k_next, k_neg = jax.random.split(key, 5)
    params = init_params(k_param)
    param_slab = pack_params(params)     # one-time wrapper-side packing

    obses = jax.random.normal(k_obs, (BS, NUM_OBS_STEPS, OBS_DIM), jnp.float32)
    actions = jax.random.normal(k_act, (BS, NUM_PRED_STEPS, ACTION_DIM), jnp.float32)
    next_obses = jax.random.normal(k_next, (BS, NUM_PRED_STEPS, OBS_DIM), jnp.float32)
    # mimics sample_delta_feature: uniform in [delta_min, delta_max]
    neg_delta_features = (
        jax.random.uniform(k_neg,
                           (BS, NUM_PRED_STEPS, NUM_NEG_SAMPLES, FEATURE_DIM),
                           jnp.float32) * (DELTA_MAX - DELTA_MIN) + DELTA_MIN)

    energy = jax.jit(contrastive_forward)(param_slab, obses, actions, next_obses,
                                          neg_delta_features)
    energy = jax.block_until_ready(energy)

    ref = forward_reference(params, obses, actions, next_obses, neg_delta_features)

    assert energy.shape == (BS, NUM_PRED_STEPS, NUM_SAMPLES, FEATURE_DIM)
    assert energy.dtype == jnp.float32
    assert bool(jnp.all(jnp.isfinite(energy)))
    assert bool(jnp.allclose(energy, ref, rtol=1e-3, atol=1e-3))
    print("KERNEL_OK")
</pallas_src>

<mosaic_0001>
module attributes {stable_mosaic.version = 11 : i64} {
  func.func @_contrastive_fwd_kernel(%arg0: i32, %arg1: memref<48x16xf32, #tpu.memory_space<vmem>>, %arg2: memref<104x128xf32, #tpu.memory_space<vmem>>, %arg3: memref<32x128xf32, #tpu.memory_space<vmem>>) attributes {dimension_semantics = [#tpu.dimension_semantics<arbitrary>], iteration_bounds = array<i64: 1>, scalar_prefetch = 0 : i64, scratch_operands = 0 : i64, tpu.core_type = #tpu.core_type<tc>, window_params = [{pipeline_mode = #tpu.pipeline_mode<synchronous>, transform_indices = @transform_0, window_bounds = array<i64: 48, 16>}, {pipeline_mode = #tpu.pipeline_mode<synchronous>, transform_indices = @transform_1, window_bounds = array<i64: 104, 128>}, {pipeline_mode = #tpu.pipeline_mode<synchronous>, transform_indices = @transform_2, window_bounds = array<i64: 32, 128>}]} {
    %c0 = arith.constant 0 : index
    %c0_0 = arith.constant 0 : index
    %0 = vector.load %arg2[%c0, %c0_0] : memref<104x128xf32, #tpu.memory_space<vmem>>, vector<16x8xf32>
    %c16 = arith.constant 16 : index
    %c0_1 = arith.constant 0 : index
    %1 = vector.load %arg2[%c16, %c0_1] : memref<104x128xf32, #tpu.memory_space<vmem>>, vector<8x32xf32>
    %c24 = arith.constant 24 : index
    %c0_2 = arith.constant 0 : index
    %2 = vector.load %arg2[%c24, %c0_2] : memref<104x128xf32, #tpu.memory_space<vmem>>, vector<8x32xf32>
    %c32 = arith.constant 32 : index
    %c0_3 = arith.constant 0 : index
    %3 = vector.load %arg2[%c32, %c0_3] : memref<104x128xf32, #tpu.memory_space<vmem>>, vector<8x32xf32>
    %c40 = arith.constant 40 : index
    %c0_4 = arith.constant 0 : index
    %4 = vector.load %arg2[%c40, %c0_4] : memref<104x128xf32, #tpu.memory_space<vmem>>, vector<8x32xf32>
    %c48 = arith.constant 48 : index
    %c0_5 = arith.constant 0 : index
    %5 = vector.load %arg2[%c48, %c0_5] : memref<104x128xf32, #tpu.memory_space<vmem>>, vector<32x128xf32>
    %c80 = arith.constant 80 : index
    %c0_6 = arith.constant 0 : index
    %6 = vector.load %arg2[%c80, %c0_6] : memref<104x128xf32, #tpu.memory_space<vmem>>, vector<1x8xf32>
    %c88 = arith.constant 88 : index
    %c0_7 = arith.constant 0 : index
    %7 = vector.load %arg2[%c88, %c0_7] : memref<104x128xf32, #tpu.memory_space<vmem>>, vector<1x32xf32>
    %c96 = arith.constant 96 : index
    %c0_8 = arith.constant 0 : index
    %8 = vector.load %arg2[%c96, %c0_8] : memref<104x128xf32, #tpu.memory_space<vmem>>, vector<1x128xf32>
    %c0_9 = arith.constant 0 : index
    %c0_10 = arith.constant 0 : index
    %9 = vector.load %arg1[%c0_9, %c0_10] : memref<48x16xf32, #tpu.memory_space<vmem>>, vector<8x16xf32>
    %cst = arith.constant dense<0.000000e+00> : vector<8x8xf32>
    %10 = tpu.matmul %9, %0, %cst {dimension_numbers = #tpu.dot_dimension_numbers<[1], [0], [0], [1], [0, 0, 1, 1], [], []>} : vector<8x16xf32>, vector<16x8xf32>, vector<8x8xf32> -> vector<8x8xf32>
    %11 = vector.broadcast %6 : vector<1x8xf32> to vector<8x8xf32>
    %12 = arith.addf %10, %11 : vector<8x8xf32>
    %c8 = arith.constant 8 : index
    %c0_11 = arith.constant 0 : index
    %13 = vector.load %arg1[%c8, %c0_11] : memref<48x16xf32, #tpu.memory_space<vmem>>, vector<4x8xf32>
    %cst_12 = arith.constant dense<0.000000e+00> : vector<4x32xf32>
    %14 = tpu.matmul %13, %3, %cst_12 {dimension_numbers = #tpu.dot_dimension_numbers<[1], [0], [0], [1], [0, 0, 1, 1], [], []>} : vector<4x8xf32>, vector<8x32xf32>, vector<4x32xf32> -> vector<4x32xf32>
    %c16_13 = arith.constant 16 : index
    %c0_14 = arith.constant 0 : index
    %15 = vector.load %arg1[%c16_13, %c0_14] : memref<48x16xf32, #tpu.memory_space<vmem>>, vector<28x8xf32>
    %16 = tpu.iota {dimensions = array<i32: 0>} : vector<16x2xi32>
    %17 = tpu.iota {dimensions = array<i32: 1>} : vector<16x2xi32>
    %c14_i32 = arith.constant 14 : i32
    %18 = vector.broadcast %c14_i32 : i32 to vector<16x2xi32>
    %19 = arith.cmpi slt, %16, %18 : vector<16x2xi32>
    %c0_i32 = arith.constant 0 : i32
    %20 = vector.broadcast %c0_i32 : i32 to vector<16x2xi32>
    %c7_i32 = arith.constant 7 : i32
    %21 = vector.broadcast %c7_i32 : i32 to vector<16x2xi32>
    %22 = arith.cmpi sge, %16, %21 : vector<16x2xi32>
    %23 = arith.extui %22 : vector<16x2xi1> to vector<16x2xi32>
    %24 = arith.addi %20, %23 : vector<16x2xi32>
    %c14_i32_15 = arith.constant 14 : i32
    %25 = vector.broadcast %c14_i32_15 : i32 to vector<16x2xi32>
    %26 = arith.subi %16, %25 : vector<16x2xi32>
    %27 = arith.select %19, %24, %26 : vector<16x2xi1>, vector<16x2xi32>
    %28 = arith.cmpi eq, %27, %17 : vector<16x2xi32>
    %29 = arith.extui %28 : vector<16x2xi1> to vector<16x2xi32>
    %30 = arith.sitofp %29 : vector<16x2xi32> to vector<16x2xf32>
    %31 = tpu.iota {dimensions = array<i32: 0>} : vector<14x2xi32>
    %32 = tpu.iota {dimensions = array<i32: 1>} : vector<14x2xi32>
    %c0_i32_16 = arith.constant 0 : i32
    %33 = vector.broadcast %c0_i32_16 : i32 to vector<14x2xi32>
    %c7_i32_17 = arith.constant 7 : i32
    %34 = vector.broadcast %c7_i32_17 : i32 to vector<14x2xi32>
    %35 = arith.cmpi sge, %31, %34 : vector<14x2xi32>
    %36 = arith.extui %35 : vector<14x2xi1> to vector<14x2xi32>
    %37 = arith.addi %33, %36 : vector<14x2xi32>
    %38 = arith.cmpi eq, %37, %32 : vector<14x2xi32>
    %39 = arith.extui %38 : vector<14x2xi1> to vector<14x2xi32>
    %40 = arith.sitofp %39 : vector<14x2xi32> to vector<14x2xf32>
    %41 = tpu.iota {dimensions = array<i32: 1>} : vector<2x14xi32>
    %42 = tpu.iota {dimensions = array<i32: 0>} : vector<2x14xi32>
    %c0_i32_18 = arith.constant 0 : i32
    %43 = vector.broadcast %c0_i32_18 : i32 to vector<2x14xi32>
    %c7_i32_19 = arith.constant 7 : i32
    %44 = vector.broadcast %c7_i32_19 : i32 to vector<2x14xi32>
    %45 = arith.cmpi sge, %41, %44 : vector<2x14xi32>
    %46 = arith.extui %45 : vector<2x14xi1> to vector<2x14xi32>
    %47 = arith.addi %43, %46 : vector<2x14xi32>
    %48 = arith.cmpi eq, %47, %42 : vector<2x14xi32>
    %49 = arith.extui %48 : vector<2x14xi1> to vector<2x14xi32>
    %50 = arith.sitofp %49 : vector<2x14xi32> to vector<2x14xf32>
    %51 = tpu.iota {dimensions = array<i32: 1>} : vector<2x14x8xi32>
    %52 = tpu.iota {dimensions = array<i32: 0>} : vector<2x14x8xi32>
    %c0_i32_20 = arith.constant 0 : i32
    %53 = vector.broadcast %c0_i32_20 : i32 to vector<2x14x8xi32>
    %c7_i32_21 = arith.constant 7 : i32
    %54 = vector.broadcast %c7_i32_21 : i32 to vector<2x14x8xi32>
    %55 = arith.cmpi sge, %51, %54 : vector<2x14x8xi32>
    %56 = arith.extui %55 : vector<2x14x8xi1> to vector<2x14x8xi32>
    %57 = arith.addi %53, %56 : vector<2x14x8xi32>
    %58 = arith.cmpi eq, %57, %52 : vector<2x14x8xi32>
    %59 = tpu.iota {dimensions = array<i32: 0>} : vector<14x8xi32>
    %c0_i32_22 = arith.constant 0 : i32
    %60 = vector.broadcast %c0_i32_22 : i32 to vector<14x8xi32>
    %c7_i32_23 = arith.constant 7 : i32
    %61 = vector.broadcast %c7_i32_23 : i32 to vector<14x8xi32>
    %62 = arith.cmpi sge, %59, %61 : vector<14x8xi32>
    %63 = arith.extui %62 : vector<14x8xi1> to vector<14x8xi32>
    %64 = arith.addi %60, %63 : vector<14x8xi32>
    %c7_i32_24 = arith.constant 7 : i32
    %65 = vector.broadcast %c7_i32_24 : i32 to vector<14x8xi32>
    %66 = arith.muli %64, %65 : vector<14x8xi32>
    %67 = arith.subi %59, %66 : vector<14x8xi32>
    %68 = arith.sitofp %67 : vector<14x8xi32> to vector<14x8xf32>
    %69 = vector.extract_strided_slice %12 {offsets = [0, 0], sizes = [2, 8], strides = [1, 1]} : vector<8x8xf32> to vector<2x8xf32>
    %70 = vector.extract_strided_slice %12 {offsets = [2, 0], sizes = [2, 8], strides = [1, 1]} : vector<8x8xf32> to vector<2x8xf32>
    %71 = vector.extract_strided_slice %12 {offsets = [4, 0], sizes = [2, 8], strides = [1, 1]} : vector<8x8xf32> to vector<2x8xf32>
    %72 = vector.extract_strided_slice %15 {offsets = [0, 0], sizes = [14, 8], strides = [1, 1]} : vector<28x8xf32> to vector<14x8xf32>
    %73 = vector.extract_strided_slice %14 {offsets = [0, 0], sizes = [2, 32], strides = [1, 1]} : vector<4x32xf32> to vector<2x32xf32>
    %74 = vector.broadcast %7 : vector<1x32xf32> to vector<2x32xf32>
    %75 = arith.addf %73, %74 : vector<2x32xf32>
    %cst_25 = arith.constant dense<0.000000e+00> : vector<2x32xf32>
    %76 = tpu.matmul %69, %1, %cst_25 {dimension_numbers = #tpu.dot_dimension_numbers<[1], [0], [0], [1], [0, 0, 1, 1], [], []>} : vector<2x8xf32>, vector<8x32xf32>, vector<2x32xf32> -> vector<2x32xf32>
    %77 = arith.addf %75, %76 : vector<2x32xf32>
    %cst_26 = arith.constant dense<0.000000e+00> : vector<2x32xf32>
    %78 = tpu.matmul %70, %2, %cst_26 {dimension_numbers = #tpu.dot_dimension_numbers<[1], [0], [0], [1], [0, 0, 1, 1], [], []>} : vector<2x8xf32>, vector<8x32xf32>, vector<2x32xf32> -> vector<2x32xf32>
    %79 = arith.addf %77, %78 : vector<2x32xf32>
    %80 = arith.subf %71, %70 : vector<2x8xf32>
    %81 = tpu.concatenate %72, %80 in 0 : vector<14x8xf32>, vector<2x8xf32> -> vector<16x8xf32>
    %cst_27 = arith.constant dense<0.000000e+00> : vector<16x32xf32>
    %82 = tpu.matmul %30, %79, %cst_27 {dimension_numbers = #tpu.dot_dimension_numbers<[1], [0], [0], [1], [0, 0, 1, 1], [], []>} : vector<16x2xf32>, vector<2x32xf32>, vector<16x32xf32> -> vector<16x32xf32>
    %cst_28 = arith.constant dense<0.000000e+00> : vector<16x32xf32>
    %83 = tpu.matmul %81, %4, %cst_28 {dimension_numbers = #tpu.dot_dimension_numbers<[1], [0], [0], [1], [0, 0, 1, 1], [], []>} : vector<16x8xf32>, vector<8x32xf32>, vector<16x32xf32> -> vector<16x32xf32>
    %84 = arith.addf %82, %83 : vector<16x32xf32>
    %cst_29 = arith.constant 0.000000e+00 : f32
    %85 = vector.broadcast %cst_29 : f32 to vector<16x32xf32>
    %86 = arith.maximumf %84, %85 : vector<16x32xf32>
    %cst_30 = arith.constant dense<0.000000e+00> : vector<16x128xf32>
    %87 = tpu.matmul %86, %5, %cst_30 {dimension_numbers = #tpu.dot_dimension_numbers<[1], [0], [0], [1], [0, 0, 1, 1], [], []>} : vector<16x32xf32>, vector<32x128xf32>, vector<16x128xf32> -> vector<16x128xf32>
    %88 = vector.broadcast %8 : vector<1x128xf32> to vector<16x128xf32>
    %89 = arith.addf %87, %88 : vector<16x128xf32>
    %c0_31 = arith.constant 0 : index
    %c0_32 = arith.constant 0 : index
    %90 = vector.load %arg3[%c0_31, %c0_32] : memref<32x128xf32, #tpu.memory_space<vmem>>, vector<16x128xf32>
    tpu.vector_store %arg3[%c0_31, %c0_32], %89 {strides = array<i32>} : memref<32x128xf32, #tpu.memory_space<vmem>>, vector<16x128xf32>,
    %91 = vector.extract_strided_slice %89 {offsets = [0, 0], sizes = [14, 8], strides = [1, 1]} : vector<16x128xf32> to vector<14x8xf32>
    %92 = vector.shape_cast %91 : vector<14x8xf32> to vector<1x14x8xf32>
    %cst_33 = arith.constant 0xFF800000 : f32
    %93 = vector.shape_cast %92 : vector<1x14x8xf32> to vector<1x14x8xf32>
    %94 = vector.broadcast %93 : vector<1x14x8xf32> to vector<2x14x8xf32>
    %95 = vector.broadcast %cst_33 : f32 to vector<2x14x8xf32>
    %96 = arith.select %58, %94, %95 : vector<2x14x8xi1>, vector<2x14x8xf32>
    %cst_34 = arith.constant dense<0xFF800000> : vector<2x8xf32>
    %97 = vector.multi_reduction <maximumf>, %96, %cst_34 [1] : vector<2x14x8xf32> to vector<2x8xf32>
    %cst_35 = arith.constant dense<0.000000e+00> : vector<14x8xf32>
    %98 = tpu.matmul %40, %97, %cst_35 {dimension_numbers = #tpu.dot_dimension_numbers<[1], [0], [0], [1], [0, 0, 1, 1], [], []>} : vector<14x2xf32>, vector<2x8xf32>, vector<14x8xf32> -> vector<14x8xf32>
    %99 = arith.cmpf oeq, %91, %98 : vector<14x8xf32>
    %cst_36 = arith.constant 7.000000e+00 : f32
    %100 = vector.broadcast %cst_36 : f32 to vector<14x8xf32>
    %101 = arith.select %99, %68, %100 : vector<14x8xi1>, vector<14x8xf32>
    %102 = vector.shape_cast %101 : vector<14x8xf32> to vector<1x14x8xf32>
    %cst_37 = arith.constant 7.000000e+00 : f32
    %103 = vector.shape_cast %102 : vector<1x14x8xf32> to vector<1x14x8xf32>
    %104 = vector.broadcast %103 : vector<1x14x8xf32> to vector<2x14x8xf32>
    %105 = vector.broadcast %cst_37 : f32 to vector<2x14x8xf32>
    %106 = arith.select %58, %104, %105 : vector<2x14x8xi1>, vector<2x14x8xf32>
    %cst_38 = arith.constant dense<0x7F800000> : vector<2x8xf32>
    %107 = vector.multi_reduction <minimumf>, %106, %cst_38 [1] : vector<2x14x8xf32> to vector<2x8xf32>
    %cst_39 = arith.constant dense<0.000000e+00> : vector<14x8xf32>
    %108 = tpu.matmul %40, %107, %cst_39 {dimension_numbers = #tpu.dot_dimension_numbers<[1], [0], [0], [1], [0, 0, 1, 1], [], []>} : vector<14x2xf32>, vector<2x8xf32>, vector<14x8xf32> -> vector<14x8xf32>
    %109 = arith.cmpf oeq, %68, %108 : vector<14x8xf32>
    %110 = arith.extui %109 : vector<14x8xi1> to vector<14x8xi32>
    %111 = arith.sitofp %110 : vector<14x8xi32> to vector<14x8xf32>
    %112 = arith.mulf %111, %72 : vector<14x8xf32>
    %cst_40 = arith.constant dense<0.000000e+00> : vector<2x8xf32>
    %113 = tpu.matmul %50, %112, %cst_40 {dimension_numbers = #tpu.dot_dimension_numbers<[1], [0], [0], [1], [0, 0, 1, 1], [], []>} : vector<2x14xf32>, vector<14x8xf32>, vector<2x8xf32> -> vector<2x8xf32>
    %114 = arith.addf %70, %113 : vector<2x8xf32>
    %115 = vector.extract_strided_slice %12 {offsets = [6, 0], sizes = [2, 8], strides = [1, 1]} : vector<8x8xf32> to vector<2x8xf32>
    %116 = vector.extract_strided_slice %15 {offsets = [14, 0], sizes = [14, 8], strides = [1, 1]} : vector<28x8xf32> to vector<14x8xf32>
    %117 = vector.extract_strided_slice %14 {offsets = [2, 0], sizes = [2, 32], strides = [1, 1]} : vector<4x32xf32> to vector<2x32xf32>
    %118 = vector.broadcast %7 : vector<1x32xf32> to vector<2x32xf32>
    %119 = arith.addf %117, %118 : vector<2x32xf32>
    %cst_41 = arith.constant dense<0.000000e+00> : vector<2x32xf32>
    %120 = tpu.matmul %70, %1, %cst_41 {dimension_numbers = #tpu.dot_dimension_numbers<[1], [0], [0], [1], [0, 0, 1, 1], [], []>} : vector<2x8xf32>, vector<8x32xf32>, vector<2x32xf32> -> vector<2x32xf32>
    %121 = arith.addf %119, %120 : vector<2x32xf32>
    %cst_42 = arith.constant dense<0.000000e+00> : vector<2x32xf32>
    %122 = tpu.matmul %114, %2, %cst_42 {dimension_numbers = #tpu.dot_dimension_numbers<[1], [0], [0], [1], [0, 0, 1, 1], [], []>} : vector<2x8xf32>, vector<8x32xf32>, vector<2x32xf32> -> vector<2x32xf32>
    %123 = arith.addf %121, %122 : vector<2x32xf32>
    %124 = arith.subf %115, %114 : vector<2x8xf32>
    %125 = tpu.concatenate %116, %124 in 0 : vector<14x8xf32>, vector<2x8xf32> -> vector<16x8xf32>
    %cst_43 = arith.constant dense<0.000000e+00> : vector<16x32xf32>
    %126 = tpu.matmul %30, %123, %cst_43 {dimension_numbers = #tpu.dot_dimension_numbers<[1], [0], [0], [1], [0, 0, 1, 1], [], []>} : vector<16x2xf32>, vector<2x32xf32>, vector<16x32xf32> -> vector<16x32xf32>
    %cst_44 = arith.constant dense<0.000000e+00> : vector<16x32xf32>
    %127 = tpu.matmul %125, %4, %cst_44 {dimension_numbers = #tpu.dot_dimension_numbers<[1], [0], [0], [1], [0, 0, 1, 1], [], []>} : vector<16x8xf32>, vector<8x32xf32>, vector<16x32xf32> -> vector<16x32xf32>
    %128 = arith.addf %126, %127 : vector<16x32xf32>
    %cst_45 = arith.constant 0.000000e+00 : f32
    %129 = vector.broadcast %cst_45 : f32 to vector<16x32xf32>
    %130 = arith.maximumf %128, %129 : vector<16x32xf32>
    %cst_46 = arith.constant dense<0.000000e+00> : vector<16x128xf32>
    %131 = tpu.matmul %130, %5, %cst_46 {dimension_numbers = #tpu.dot_dimension_numbers<[1], [0], [0], [1], [0, 0, 1, 1], [], []>} : vector<16x32xf32>, vector<32x128xf32>, vector<16x128xf32> -> vector<16x128xf32>
    %132 = vector.broadcast %8 : vector<1x128xf32> to vector<16x128xf32>
    %133 = arith.addf %131, %132 : vector<16x128xf32>
    %c16_47 = arith.constant 16 : index
    %c0_48 = arith.constant 0 : index
    %134 = vector.load %arg3[%c16_47, %c0_48] : memref<32x128xf32, #tpu.memory_space<vmem>>, vector<16x128xf32>
    tpu.vector_store %arg3[%c16_47, %c0_48], %133 {strides = array<i32>} : memref<32x128xf32, #tpu.memory_space<vmem>>, vector<16x128xf32>,
    return
  }
  func.func @transform_0(%arg0: i32) -> (i32, i32) {
    %c0_i32 = arith.constant 0 : i32
    %c0_i32_0 = arith.constant 0 : i32
    %c0_i32_1 = arith.constant 0 : i32
    return %c0_i32, %c0_i32_0 : i32, i32
  }
  func.func @transform_1(%arg0: i32) -> (i32, i32) {
    %c0_i32 = arith.constant 0 : i32
    %c0_i32_0 = arith.constant 0 : i32
    %c0_i32_1 = arith.constant 0 : i32
    return %c0_i32, %c0_i32_0 : i32, i32
  }
  func.func @transform_2(%arg0: i32) -> (i32, i32) {
    %c0_i32 = arith.constant 0 : i32
    %c0_i32_0 = arith.constant 0 : i32
    %c0_i32_1 = arith.constant 0 : i32
    return %c0_i32, %c0_i32_0 : i32, i32
  }
}

</mosaic_0001>

<llo_original>
// kernel: contrastive_forward.1
$region0: #{contrastive_forward.1}
  #allocation0 [shape = 'u32[]', space=smem, size = 0x4, offset = 0x4, fixed_abs, tag = 'smem constant byte address 0x4 - core index']
  #allocation1 [shape = 'u32[72,128]{1,0:T(1,128)}', space=vmem, size = 0x9000, scoped, tag = 'internal scratch']
  %s0 = inlined_call_operand.vmem [shape: f32[48,16], index: 0, kind: input, shape index: {}]
  %s1 = inlined_call_operand.vmem [shape: f32[104,128], index: 1, kind: input, shape index: {}]
  %s2 = inlined_call_operand.vmem [shape: f32[32,128], index: 2, kind: output, shape index: {}]
  %s3 = sld [smem:[#allocation0]]
  $region18: #{contrastive_forward.1} parent=0
    _
  %s5 = ssub.s32 1, %s3
  %s6 = scalar_select 0, %s5, %s3
  // Predicated region
  $region2: #{contrastive_forward.1} parent=0 // pred_check
    _
  $region3: #{contrastive_forward.1} parent=0 // pred_check_branch
    %8 = sbr.rel (0) target = $region5
  $region4: #{contrastive_forward.1} parent=0 // pred_region
    _
  $region5: #{contrastive_forward.1} parent=0 // pred_fallthru
    _
  // Predicated region
  $region6: #{contrastive_forward.1} parent=0 // pred_check
    _
  $region7: #{contrastive_forward.1} parent=0 // pred_check_branch
    %10 = sbr.rel (0) target = $region9
  $region8: #{contrastive_forward.1} parent=0 // pred_region
    _
  $region9: #{contrastive_forward.1} parent=0 // pred_fallthru
    _
  %v11 = vld [vmem:[%s1] sm:$0xff]
  %v12 = vld [vmem:[%s1 + $0x8] sm:$0xff]
  %v13 = vld [vmem:[%s1 + $0x10] sm:$0xff]
  %v14 = vld [vmem:[%s1 + $0x18] sm:$0xff]
  %v15 = vld [vmem:[%s1 + $0x20] sm:$0xff]
  %v16 = vld [vmem:[%s1 + $0x28] sm:$0xff]
  %v17 = vld [vmem:[%s1 + $0x30] sm:$0xff]
  %v18 = vld [vmem:[%s1 + $0x38] sm:$0xff]
  %v19 = vld [vmem:[%s1 + $0x40] sm:$0xff]
  %v20 = vld [vmem:[%s1 + $0x48] sm:$0xff]
  %v21 = vld [vmem:[%s1 + $0x50] sm:$0x1]
  %v22 = vld [vmem:[%s1 + $0x58] sm:$0x1]
  %v23 = vld [vmem:[%s1 + $0x60] sm:$0x1]
  %v24 = vld [vmem:[%s0] sm:$0xff]
  %v25 = vperm.slane %v21, 0
  %vm26 = vcmask 130048
  %v28 = vsel %vm26, %v24, 0
  %30 = vmatpush.msra.mxu0 0.0
  %31 = vmatpush.msra.mxu0 0.0
  %32 = vmatpush.msra.mxu0 0.0
  %33 = vmatpush.msra.mxu0 0.0
  %34 = vmatpush.msra.mxu0 0.0
  %35 = vmatpush.msra.mxu0 0.0
  %36 = vmatpush.msra.mxu0 0.0
  %37 = vmatpush.msra.mxu0 0.0
  %38 = vmatpush.msra.mxu0 0.0
  %39 = vmatpush.msra.mxu0 0.0
  %40 = vmatpush.msra.mxu0 0.0
  %41 = vmatpush.msra.mxu0 0.0
  %42 = vmatpush.msra.mxu0 0.0
  %43 = vmatpush.msra.mxu0 0.0
  %44 = vmatpush.msra.mxu0 %v12
  %45 = vmatpush.msra.mxu0 %v11
  %46 = vmatmul.f32.gmra.mxu0 %v28
  %v47 = vpop.f32.mrf.mxu0
  %v48 = vadd.f32 %v25, %v47
  %49 = vdwg.mxu0
  %v50 = vld [vmem:[%s0 + $0x8] sm:$0xf]
  %vm51 = vcmask 64512
  %v53 = vsel %vm51, %v50, 0
  %55 = vmatpush.msra.mxu0 0.0
  %56 = vmatpush.msra.mxu0 0.0
  %57 = vmatpush.msra.mxu0 0.0
  %58 = vmatpush.msra.mxu0 0.0
  %59 = vmatpush.msra.mxu0 0.0
  %60 = vmatpush.msra.mxu0 0.0
  %61 = vmatpush.msra.mxu0 0.0
  %62 = vmatpush.msra.mxu0 0.0
  %63 = vmatpush.msra.mxu0 0.0
  %64 = vmatpush.msra.mxu0 0.0
  %65 = vmatpush.msra.mxu0 0.0
  %66 = vmatpush.msra.mxu0 0.0
  %67 = vmatpush.msra.mxu0 0.0
  %68 = vmatpush.msra.mxu0 0.0
  %69 = vmatpush.msra.mxu0 0.0
  %70 = vmatpush.msra.mxu0 %v15
  %71 = vmatmul.f32.gmra.mxu0 %v53
  %v72 = vpop.f32.mrf.mxu0
  %v73 = vadd.f32 0.0, %v72
  %74 = vdwg.mxu0
  %v75 = vld [vmem:[%s0 + $0x10] sm:$0xff]
  %v76 = vld [vmem:[%s0 + $0x18] sm:$0xff]
  %v77 = vld [vmem:[%s0 + $0x20] sm:$0xff]
  %v78 = vld [vmem:[%s0 + $0x28] sm:$0xf]
  %v79 = vlaneseq
  %v80 = vshrl.u32 %v79, 7
  %v81 = vadd.s32 %v80, 8
  %v82 = vlaneseq
  %v83 = vand.u32 %v82, 127
  %vm84 = vcmp.lt.s32.totalorder %v80, 14
  %vm85 = vcmp.lt.s32.totalorder %v81, 14
  %vm86 = vcmp.ge.s32.totalorder %v80, 7
  %vm87 = vcmp.ge.s32.totalorder %v81, 7
  %v88 = vsel %vm86, 1, 0
  %v89 = vsel %vm87, 1, 0
  %v90 = vsub.s32 %v80, 14
  %v91 = vsub.s32 %v81, 14
  %v92 = vsel %vm84, %v88, %v90
  %v93 = vsel %vm85, %v89, %v91
  %vm94 = vcmp.eq.s32.totalorder %v92, %v83
  %vm95 = vcmp.eq.s32.totalorder %v93, %v83
  %v96 = vsel %vm94, 1, 0
  %v97 = vsel %vm95, 1, 0
  %v98 = vcvt.s32.f32 %v96
  %v99 = vcvt.s32.f32 %v97
  %vm100 = vcmp.eq.s32.totalorder %v88, %v83
  %vm101 = vcmp.eq.s32.totalorder %v89, %v83
  %v102 = vsel %vm100, 1, 0
  %v103 = vsel %vm101, 1, 0
  %v104 = vcvt.s32.f32 %v102
  %v105 = vcvt.s32.f32 %v103
  %vm106 = vcmp.ge.s32.totalorder %v83, 7
  %v107 = vsel %vm106, 1, 0
  %vm108 = vcmp.eq.s32.totalorder %v107, %v80
  %v109 = vsel %vm108, 1, 0
  %v110 = vcvt.s32.f32 %v109
  %vm111 = vcmp.eq.s32.totalorder %v88, 0
  %vm112 = vcmp.eq.s32.totalorder %v89, 0
  %vm113 = vcmp.eq.s32.totalorder %v88, 1
  %vm114 = vcmp.eq.s32.totalorder %v89, 1
  %v115 = vmul.u32 %v88, 7
  %v116 = vmul.u32 %v89, 7
  %v117 = vsub.s32 %v80, %v115
  %v118 = vsub.s32 %v81, %v116
  %v119 = vcvt.s32.f32 %v117
  %v120 = vcvt.s32.f32 %v118
  %v121 = vperm.slane %v22, 0
  %v122 = vadd.f32 %v73, %v121
  %v124 = vsel %vm51, %v48, 0
  %126 = vmatpush.msra.mxu0 0.0
  %127 = vmatpush.msra.mxu0 0.0
  %128 = vmatpush.msra.mxu0 0.0
  %129 = vmatpush.msra.mxu0 0.0
  %130 = vmatpush.msra.mxu0 0.0
  %131 = vmatpush.msra.mxu0 0.0
  %132 = vmatpush.msra.mxu0 0.0
  %133 = vmatpush.msra.mxu0 0.0
  %134 = vmatpush.msra.mxu0 0.0
  %135 = vmatpush.msra.mxu0 0.0
  %136 = vmatpush.msra.mxu0 0.0
  %137 = vmatpush.msra.mxu0 0.0
  %138 = vmatpush.msra.mxu0 0.0
  %139 = vmatpush.msra.mxu0 0.0
  %140 = vmatpush.msra.mxu0 0.0
  %141 = vmatpush.msra.mxu0 %v13
  %142 = vmatmul.f32.gmra.mxu0 %v124
  %v143 = vpop.f32.mrf.mxu0
  %v144 = vadd.f32 0.0, %v143
  %145 = vdwg.mxu0
  %v146 = vadd.f32 %v122, %v144
  %v147 = vrot.slane %v48, 2
  %v148 = vsel %vm51, %v147, 0
  %150 = vmatpush.msra.mxu0 0.0
  %151 = vmatpush.msra.mxu0 0.0
  %152 = vmatpush.msra.mxu0 0.0
  %153 = vmatpush.msra.mxu0 0.0
  %154 = vmatpush.msra.mxu0 0.0
  %155 = vmatpush.msra.mxu0 0.0
  %156 = vmatpush.msra.mxu0 0.0
  %157 = vmatpush.msra.mxu0 0.0
  %158 = vmatpush.msra.mxu0 0.0
  %159 = vmatpush.msra.mxu0 0.0
  %160 = vmatpush.msra.mxu0 0.0
  %161 = vmatpush.msra.mxu0 0.0
  %162 = vmatpush.msra.mxu0 0.0
  %163 = vmatpush.msra.mxu0 0.0
  %164 = vmatpush.msra.mxu0 0.0
  %165 = vmatpush.msra.mxu0 %v14
  %166 = vmatmul.f32.gmra.mxu0 %v148
  %v167 = vpop.f32.mrf.mxu0
  %v168 = vadd.f32 0.0, %v167
  %169 = vdwg.mxu0
  %v170 = vadd.f32 %v146, %v168
  %v171 = vrot.slane %v48, 6
  %v173 = vsub.f32 %v48, %v171
  %v175 = vrot.slane %v173, 6
  %vm177 = vcmask 1045504
  %v178 = vsel %vm177, %v76, %v175
  %v180 = vsel %vm51, %v75, 0
  %v183 = vsel %vm51, %v178, 0
  %185 = vmatpush.msra.mxu0 0.0
  %186 = vmatpush.msra.mxu0 0.0
  %187 = vmatpush.msra.mxu0 0.0
  %188 = vmatpush.msra.mxu0 0.0
  %189 = vmatpush.msra.mxu0 0.0
  %190 = vmatpush.msra.mxu0 0.0
  %191 = vmatpush.msra.mxu0 0.0
  %192 = vmatpush.msra.mxu0 0.0
  %193 = vmatpush.msra.mxu0 0.0
  %194 = vmatpush.msra.mxu0 0.0
  %195 = vmatpush.msra.mxu0 0.0
  %196 = vmatpush.msra.mxu0 0.0
  %197 = vmatpush.msra.mxu0 0.0
  %198 = vmatpush.msra.mxu0 0.0
  %199 = vmatpush.msra.mxu0 0.0
  %200 = vmatpush.msra.mxu0 %v16
  %201 = vmatmul.f32.gmra.mxu0 %v180
  %v202 = vpop.f32.mrf.mxu0
  %v203 = vadd.f32 0.0, %v202
  %204 = vmatmul.f32.gmra.mxu0 %v183
  %v205 = vpop.f32.mrf.mxu0
  %v206 = vadd.f32 0.0, %v205
  %207 = vdwg.mxu0
  %vm208 = vcmask 15360
  %v210 = vsel %vm208, %v98, 0
  %v213 = vsel %vm208, %v99, 0
  %vm215 = vcmask 1041408
  %v217 = vsel %vm215, %v170, 0
  %219 = vmatpush.msra.mxu0 0.0
  %220 = vmatpush.msra.mxu0 0.0
  %221 = vmatpush.msra.mxu0 0.0
  %222 = vmatpush.msra.mxu0 0.0
  %223 = vmatpush.msra.mxu0 0.0
  %224 = vmatpush.msra.mxu0 0.0
  %225 = vmatpush.msra.mxu0 0.0
  %226 = vmatpush.msra.mxu0 0.0
  %227 = vmatpush.msra.mxu0 0.0
  %228 = vmatpush.msra.mxu0 0.0
  %229 = vmatpush.msra.mxu0 0.0
  %230 = vmatpush.msra.mxu0 0.0
  %231 = vmatpush.msra.mxu0 0.0
  %232 = vmatpush.msra.mxu0 0.0
  %233 = vmatpush.msra.mxu0 0.0
  %234 = vmatpush.msra.mxu0 %v217
  %235 = vmatmul.f32.gmra.mxu0 %v210
  %v236 = vpop.f32.mrf.mxu0
  %v237 = vadd.f32 %v203, %v236
  %238 = vmatmul.f32.gmra.mxu0 %v213
  %v239 = vpop.f32.mrf.mxu0
  %v240 = vadd.f32 %v206, %v239
  %241 = vdwg.mxu0
  %v242 = vmax.f32 %v237, 0.0
  %v243 = vmax.f32 %v240, 0.0
  %v244 = vperm.slane %v23, 0
  %vm245 = vcmask 261120
  %v247 = vsel %vm245, %v242, 0
  %v250 = vsel %vm245, %v243, 0
  %252 = vmatpush.msra.mxu0 0.0
  %253 = vmatpush.msra.mxu0 0.0
  %254 = vmatpush.msra.mxu0 0.0
  %255 = vmatpush.msra.mxu0 0.0
  %256 = vmatpush.msra.mxu0 0.0
  %257 = vmatpush.msra.mxu0 0.0
  %258 = vmatpush.msra.mxu0 0.0
  %259 = vmatpush.msra.mxu0 0.0
  %260 = vmatpush.msra.mxu0 0.0
  %261 = vmatpush.msra.mxu0 0.0
  %262 = vmatpush.msra.mxu0 0.0
  %263 = vmatpush.msra.mxu0 0.0
  %264 = vmatpush.msra.mxu0 %v20
  %265 = vmatpush.msra.mxu0 %v19
  %266 = vmatpush.msra.mxu0 %v18
  %267 = vmatpush.msra.mxu0 %v17
  %268 = vmatmul.f32.gmra.mxu0 %v247
  %v269 = vpop.f32.mrf.mxu0
  %v270 = vadd.f32 %v244, %v269
  %271 = vmatmul.f32.gmra.mxu0 %v250
  %v272 = vpop.f32.mrf.mxu0
  %v273 = vadd.f32 %v244, %v272
  %274 = vdwg.mxu0
  %275 = vst [vmem:[%s2] sm:$0xff] %v270
  %276 = vst [vmem:[%s2 + $0x8] sm:$0xff] %v273
  %v277 = vsel %vm111, %v270, -inf
  %v278 = vsel %vm112, %v273, -inf
  %v279 = vsel %vm113, %v270, -inf
  %v280 = vsel %vm114, %v273, -inf
  %v281 = vsel %vm51, %v277, -inf
  %vm282 = vcmask 62464
  %v283 = vsel %vm282, %v278, -inf
  %v284 = vmax.f32 %v281, %v283
  %v285 = vrot.slane %v284, 4
  %v286 = vmax.f32 %v284, %v285
  %v287 = vrot.slane %v286, 2
  %v288 = vmax.f32 %v286, %v287
  %v289 = vrot.slane %v288, 1
  %v290 = vmax.f32 %v288, %v289
  %v291 = vsel %vm51, %v279, -inf
  %v292 = vsel %vm282, %v280, -inf
  %v293 = vmax.f32 %v291, %v292
  %v294 = vrot.slane %v293, 4
  %v295 = vmax.f32 %v293, %v294
  %v296 = vrot.slane %v295, 2
  %v297 = vmax.f32 %v295, %v296
  %v298 = vrot.slane %v297, 1
  %v299 = vmax.f32 %v297, %v298
  %vm302 = vcmask 1041409
  %v303 = vsel %vm302, %v299, %v290
  %v305 = vsel %vm208, %v104, 0
  %v308 = vsel %vm208, %v105, 0
  %v310 = vsel %vm215, %v303, 0
  %312 = vmatpush.msra.mxu0 0.0
  %313 = vmatpush.msra.mxu0 0.0
  %314 = vmatpush.msra.mxu0 0.0
  %315 = vmatpush.msra.mxu0 0.0
  %316 = vmatpush.msra.mxu0 0.0
  %317 = vmatpush.msra.mxu0 0.0
  %318 = vmatpush.msra.mxu0 0.0
  %319 = vmatpush.msra.mxu0 0.0
  %320 = vmatpush.msra.mxu0 0.0
  %321 = vmatpush.msra.mxu0 0.0
  %322 = vmatpush.msra.mxu0 0.0
  %323 = vmatpush.msra.mxu0 0.0
  %324 = vmatpush.msra.mxu0 0.0
  %325 = vmatpush.msra.mxu0 0.0
  %326 = vmatpush.msra.mxu0 0.0
  %327 = vmatpush.msra.mxu0 %v310
  %328 = vmatmul.f32.gmra.mxu0 %v305
  %v329 = vpop.f32.mrf.mxu0
  %v330 = vadd.f32 0.0, %v329
  %331 = vmatmul.f32.gmra.mxu0 %v308
  %v332 = vpop.f32.mrf.mxu0
  %v333 = vadd.f32 0.0, %v332
  %334 = vdwg.mxu0
  %vm335 = vcmp.eq.f32.partialorder %v270, %v330
  %vm336 = vcmp.eq.f32.partialorder %v273, %v333
  %v337 = vsel %vm335, %v119, 7.0
  %v338 = vsel %vm336, %v120, 7.0
  %v339 = vsel %vm111, %v337, 7.0
  %v340 = vsel %vm112, %v338, 7.0
  %v341 = vsel %vm113, %v337, 7.0
  %v342 = vsel %vm114, %v338, 7.0
  %v343 = vsel %vm51, %v339, inf
  %v344 = vsel %vm282, %v340, inf
  %v345 = vmin.f32 %v343, %v344
  %v346 = vrot.slane %v345, 4
  %v347 = vmin.f32 %v345, %v346
  %v348 = vrot.slane %v347, 2
  %v349 = vmin.f32 %v347, %v348
  %v350 = vrot.slane %v349, 1
  %v351 = vmin.f32 %v349, %v350
  %v352 = vsel %vm51, %v341, inf
  %v353 = vsel %vm282, %v342, inf
  %v354 = vmin.f32 %v352, %v353
  %v355 = vrot.slane %v354, 4
  %v356 = vmin.f32 %v354, %v355
  %v357 = vrot.slane %v356, 2
  %v358 = vmin.f32 %v356, %v357
  %v359 = vrot.slane %v358, 1
  %v360 = vmin.f32 %v358, %v359
  %v363 = vsel %vm302, %v360, %v351
  %v364 = vsel %vm215, %v363, 0
  %366 = vmatpush.msra.mxu0 0.0
  %367 = vmatpush.msra.mxu0 0.0
  %368 = vmatpush.msra.mxu0 0.0
  %369 = vmatpush.msra.mxu0 0.0
  %370 = vmatpush.msra.mxu0 0.0
  %371 = vmatpush.msra.mxu0 0.0
  %372 = vmatpush.msra.mxu0 0.0
  %373 = vmatpush.msra.mxu0 0.0
  %374 = vmatpush.msra.mxu0 0.0
  %375 = vmatpush.msra.mxu0 0.0
  %376 = vmatpush.msra.mxu0 0.0
  %377 = vmatpush.msra.mxu0 0.0
  %378 = vmatpush.msra.mxu0 0.0
  %379 = vmatpush.msra.mxu0 0.0
  %380 = vmatpush.msra.mxu0 0.0
  %381 = vmatpush.msra.mxu0 %v364
  %382 = vmatmul.f32.gmra.mxu0 %v305
  %v383 = vpop.f32.mrf.mxu0
  %v384 = vadd.f32 0.0, %v383
  %385 = vmatmul.f32.gmra.mxu0 %v308
  %v386 = vpop.f32.mrf.mxu0
  %v387 = vadd.f32 0.0, %v386
  %388 = vdwg.mxu0
  %vm389 = vcmp.eq.f32.partialorder %v119, %v384
  %vm390 = vcmp.eq.f32.partialorder %v120, %v387
  %v391 = vsel %vm389, 1, 0
  %v392 = vsel %vm390, 1, 0
  %v393 = vcvt.s32.f32 %v391
  %v394 = vcvt.s32.f32 %v392
  %v395 = vmul.f32 %v393, %v75
  %v396 = vmul.f32 %v394, %v76
  %vm397 = vcmask 113664
  %v399 = vsel %vm397, %v110, 0
  %v402 = vsel %vm177, %v396, 0
  %404 = vmatpush.msra.mxu0 0.0
  %405 = vmatpush.msra.mxu0 0.0
  %406 = vmatpush.msra.mxu0 0.0
  %407 = vmatpush.msra.mxu0 0.0
  %408 = vmatpush.msra.mxu0 0.0
  %409 = vmatpush.msra.mxu0 0.0
  %410 = vmatpush.msra.mxu0 0.0
  %411 = vmatpush.msra.mxu0 0.0
  %412 = vmatpush.msra.mxu0 0.0
  %413 = vmatpush.msra.mxu0 0.0
  %414 = vmatpush.msra.mxu0 0.0
  %415 = vmatpush.msra.mxu0 0.0
  %416 = vmatpush.msra.mxu0 0.0
  %417 = vmatpush.msra.mxu0 0.0
  %418 = vmatpush.msra.mxu0 %v402
  %419 = vmatpush.msra.mxu0 %v395
  %420 = vmatmul.f32.gmra.mxu0 %v399
  %v421 = vpop.f32.mrf.mxu0
  %v422 = vadd.f32 0.0, %v421
  %423 = vdwg.mxu0
  %v425 = vrot.slane %v422, 6
  %v427 = vadd.f32 %v48, %v425
  %428 = vmatpush.msra.mxu0 0.0
  %429 = vmatpush.msra.mxu0 0.0
  %430 = vmatpush.msra.mxu0 0.0
  %431 = vmatpush.msra.mxu0 0.0
  %432 = vmatpush.msra.mxu0 0.0
  %433 = vmatpush.msra.mxu0 0.0
  %434 = vmatpush.msra.mxu0 0.0
  %435 = vmatpush.msra.mxu0 0.0
  %436 = vmatpush.msra.mxu0 0.0
  %437 = vmatpush.msra.mxu0 0.0
  %438 = vmatpush.msra.mxu0 0.0
  %439 = vmatpush.msra.mxu0 0.0
  %440 = vmatpush.msra.mxu0 0.0
  %441 = vmatpush.msra.mxu0 0.0
  %442 = vmatpush.msra.mxu0 0.0
  %443 = vmatpush.msra.mxu0 %v13
  %444 = vmatmul.f32.gmra.mxu0 %v148
  %v445 = vpop.f32.mrf.mxu0
  %v446 = vadd.f32 0.0, %v445
  %447 = vdwg.mxu0
  %v449 = vrot.slane %v446, 6
  %v451 = vadd.f32 %v122, %v449
  %v453 = vrot.slane %v427, 2
  %v454 = vsel %vm51, %v453, 0
  %456 = vmatpush.msra.mxu0 0.0
  %457 = vmatpush.msra.mxu0 0.0
  %458 = vmatpush.msra.mxu0 0.0
  %459 = vmatpush.msra.mxu0 0.0
  %460 = vmatpush.msra.mxu0 0.0
  %461 = vmatpush.msra.mxu0 0.0
  %462 = vmatpush.msra.mxu0 0.0
  %463 = vmatpush.msra.mxu0 0.0
  %464 = vmatpush.msra.mxu0 0.0
  %465 = vmatpush.msra.mxu0 0.0
  %466 = vmatpush.msra.mxu0 0.0
  %467 = vmatpush.msra.mxu0 0.0
  %468 = vmatpush.msra.mxu0 0.0
  %469 = vmatpush.msra.mxu0 0.0
  %470 = vmatpush.msra.mxu0 0.0
  %471 = vmatpush.msra.mxu0 %v14
  %472 = vmatmul.f32.gmra.mxu0 %v454
  %v473 = vpop.f32.mrf.mxu0
  %v474 = vadd.f32 0.0, %v473
  %475 = vdwg.mxu0
  %v477 = vrot.slane %v474, 6
  %v479 = vadd.f32 %v451, %v477
  %v480 = vrot.slane %v427, 4
  %v482 = vsub.f32 %v48, %v480
  %v486 = vrot.slane %v76, 6
  %v487 = vrot.slane %v77, 6
  %v488 = vsel %vm215, %v486, %v487
  %v489 = vrot.slane %v78, 6
  %v490 = vsel %vm215, %v487, %v489
  %v492 = vsel %vm177, %v490, %v482
  %v493 = vsel %vm51, %v488, 0
  %v496 = vsel %vm51, %v492, 0
  %498 = vmatpush.msra.mxu0 0.0
  %499 = vmatpush.msra.mxu0 0.0
  %500 = vmatpush.msra.mxu0 0.0
  %501 = vmatpush.msra.mxu0 0.0
  %502 = vmatpush.msra.mxu0 0.0
  %503 = vmatpush.msra.mxu0 0.0
  %504 = vmatpush.msra.mxu0 0.0
  %505 = vmatpush.msra.mxu0 0.0
  %506 = vmatpush.msra.mxu0 0.0
  %507 = vmatpush.msra.mxu0 0.0
  %508 = vmatpush.msra.mxu0 0.0
  %509 = vmatpush.msra.mxu0 0.0
  %510 = vmatpush.msra.mxu0 0.0
  %511 = vmatpush.msra.mxu0 0.0
  %512 = vmatpush.msra.mxu0 0.0
  %513 = vmatpush.msra.mxu0 %v16
  %514 = vmatmul.f32.gmra.mxu0 %v493
  %v515 = vpop.f32.mrf.mxu0
  %v516 = vadd.f32 0.0, %v515
  %517 = vmatmul.f32.gmra.mxu0 %v496
  %v518 = vpop.f32.mrf.mxu0
  %v519 = vadd.f32 0.0, %v518
  %520 = vdwg.mxu0
  %v522 = vrot.slane %v479, 2
  %v523 = vsel %vm215, %v522, 0
  %525 = vmatpush.msra.mxu0 0.0
  %526 = vmatpush.msra.mxu0 0.0
  %527 = vmatpush.msra.mxu0 0.0
  %528 = vmatpush.msra.mxu0 0.0
  %529 = vmatpush.msra.mxu0 0.0
  %530 = vmatpush.msra.mxu0 0.0
  %531 = vmatpush.msra.mxu0 0.0
  %532 = vmatpush.msra.mxu0 0.0
  %533 = vmatpush.msra.mxu0 0.0
  %534 = vmatpush.msra.mxu0 0.0
  %535 = vmatpush.msra.mxu0 0.0
  %536 = vmatpush.msra.mxu0 0.0
  %537 = vmatpush.msra.mxu0 0.0
  %538 = vmatpush.msra.mxu0 0.0
  %539 = vmatpush.msra.mxu0 0.0
  %540 = vmatpush.msra.mxu0 %v523
  %541 = vmatmul.f32.gmra.mxu0 %v210
  %v542 = vpop.f32.mrf.mxu0
  %v543 = vadd.f32 %v516, %v542
  %544 = vmatmul.f32.gmra.mxu0 %v213
  %v545 = vpop.f32.mrf.mxu0
  %v546 = vadd.f32 %v519, %v545
  %547 = vdwg.mxu0
  %v548 = vmax.f32 %v543, 0.0
  %v549 = vmax.f32 %v546, 0.0
  %v551 = vsel %vm245, %v548, 0
  %v554 = vsel %vm245, %v549, 0
  %556 = vmatpush.msra.mxu0 0.0
  %557 = vmatpush.msra.mxu0 0.0
  %558 = vmatpush.msra.mxu0 0.0
  %559 = vmatpush.msra.mxu0 0.0
  %560 = vmatpush.msra.mxu0 0.0
  %561 = vmatpush.msra.mxu0 0.0
  %562 = vmatpush.msra.mxu0 0.0
  %563 = vmatpush.msra.mxu0 0.0
  %564 = vmatpush.msra.mxu0 0.0
  %565 = vmatpush.msra.mxu0 0.0
  %566 = vmatpush.msra.mxu0 0.0
  %567 = vmatpush.msra.mxu0 0.0
  %568 = vmatpush.msra.mxu0 %v20
  %569 = vmatpush.msra.mxu0 %v19
  %570 = vmatpush.msra.mxu0 %v18
  %571 = vmatpush.msra.mxu0 %v17
  %572 = vmatmul.f32.gmra.mxu0 %v551
  %v573 = vpop.f32.mrf.mxu0
  %v574 = vadd.f32 %v244, %v573
  %575 = vmatmul.f32.gmra.mxu0 %v554
  %v576 = vpop.f32.mrf.mxu0
  %v577 = vadd.f32 %v244, %v576
  %578 = vdwg.mxu0
  %579 = vst [vmem:[%s2 + $0x10] sm:$0xff] %v574
  %580 = vst [vmem:[%s2 + $0x18] sm:$0xff] %v577
  // Predicated region
  $region10: #{contrastive_forward.1} parent=0 // pred_check
    _
  $region11: #{contrastive_forward.1} parent=0 // pred_check_branch
    %582 = sbr.rel (0) target = $region13
  $region12: #{contrastive_forward.1} parent=0 // pred_region
    _
  $region13: #{contrastive_forward.1} parent=0 // pred_fallthru
    _
  // Predicated region
  $region14: #{contrastive_forward.1} parent=0 // pred_check
    _
  $region15: #{contrastive_forward.1} parent=0 // pred_check_branch
    %584 = sbr.rel (0) target = $region17
  $region16: #{contrastive_forward.1} parent=0 // pred_region
    _
  $region17: #{contrastive_forward.1} parent=0 // pred_fallthru
    _

</llo_original>
